<compile_context>
chip_gen: v5e
topology: v5e:2x2
jax: 0.10.0
libtpu: 0.0.40
codegen_flags: <defaults>
</compile_context>

<pallas_src>
import jax
import jax.numpy as jnp
from jax.experimental import pallas as pl
from jax.experimental.pallas import tpu as pltpu


def _round_up(x, m):
    return (x + m - 1) // m * m


def _choose_batch_tile(n, rows_pad, target_m=256):
    """Pick samples-per-block so the matmul M dim approaches ~256 rows,
    while keeping >= 2 grid blocks (one per TensorCore on v7x) when n >= 2."""
    bt = max(1, target_m // rows_pad)
    if n >= 2:
        bt = min(bt, (n + 1) // 2)
    return max(1, min(bt, n))


def _fused_two_layer_conv(x, w1b, b1t, w2b, b2t, *, bt, rows_pad):
    """x: (n_pad, H, W*Cin) lane-dense, n_pad % bt == 0.

    Returns (feat1, feat2) with shapes (n_pad, H, W*C1/2) - raw (pre-ReLU)
    conv outputs in lane-dense layout.  conv1+ReLU+conv2 are fused; the ReLU
    activation never leaves VMEM.
    """
    n_pad, h, wcin = x.shape
    wc1 = w1b.shape[2]
    wc2 = w2b.shape[2]
    rp = rows_pad                      # per-sample rows in the padded slabs
    n_blocks = n_pad // bt
    m_acc = bt * rp                    # matmul M rows (multiple of 8)
    slab = 8 + bt * rp                 # 8 leading zero rows + bt sample blocks

    def kernel(x_ref, w1_ref, b1_ref, w2_ref, b2_ref, f1_ref, f2_ref,
               xp_ref, a1p_ref):
        # ---- stage the input block into the per-sample H-padded slab ----
        # Sample b's data rows live at [8 + b*rp, 8 + b*rp + h); the rows
        # around them (leading 8 + per-sample trailing chunk) are zeroed each
        # step - exactly the pad rows the shifted matmuls read (megacore-safe,
        # no full-buffer splat).
        zin = jnp.zeros((8, wcin), jnp.float32)
        z1 = jnp.zeros((8, wc1), jnp.float32)
        ztail_in = jnp.zeros((rp - h, wcin), jnp.float32)
        ztail_1 = jnp.zeros((rp - h, wc1), jnp.float32)

        xp_ref[0:8, :] = zin
        a1p_ref[0:8, :] = z1
        for b in range(bt):
            base = 8 + b * rp
            xp_ref[base:base + h, :] = x_ref[b].astype(jnp.float32)
            xp_ref[base + h:base + rp, :] = ztail_in
            a1p_ref[base + h:base + rp, :] = ztail_1

        # ---- conv1: 3 banded matmuls over row-shifted views of the slab ----
        # (the dy=1,2 views are sublane-unaligned; accepted at this size)
        acc1 = jnp.dot(xp_ref[0:m_acc, :], w1_ref[0],
                       preferred_element_type=jnp.float32)
        acc1 = acc1 + jnp.dot(xp_ref[1:1 + m_acc, :], w1_ref[1],
                              preferred_element_type=jnp.float32)
        acc1 = acc1 + jnp.dot(xp_ref[2:2 + m_acc, :], w1_ref[2],
                              preferred_element_type=jnp.float32)
        pre1 = acc1 + b1_ref[...]

        # hooked conv1 output + ReLU handoff (handoff stays in VMEM)
        for b in range(bt):
            src = 7 + b * rp
            pre1_b = pre1[src:src + h, :]
            f1_ref[b] = pre1_b.astype(f1_ref.dtype)
            a1p_ref[8 + b * rp:8 + b * rp + h, :] = jnp.maximum(pre1_b, 0.0)

        # ---- conv2: same 3 banded matmuls over the ReLU slab ----
        acc2 = jnp.dot(a1p_ref[0:m_acc, :], w2_ref[0],
                       preferred_element_type=jnp.float32)
        acc2 = acc2 + jnp.dot(a1p_ref[1:1 + m_acc, :], w2_ref[1],
                              preferred_element_type=jnp.float32)
        acc2 = acc2 + jnp.dot(a1p_ref[2:2 + m_acc, :], w2_ref[2],
                              preferred_element_type=jnp.float32)
        pre2 = acc2 + b2_ref[...]
        for b in range(bt):
            src = 7 + b * rp
            f2_ref[b] = pre2[src:src + h, :].astype(f2_ref.dtype)

    grid_spec = pltpu.PrefetchScalarGridSpec(
        num_scalar_prefetch=0,
        grid=(n_blocks,),
        in_specs=[
            pl.BlockSpec((bt, h, wcin), lambda i: (i, 0, 0)),
            pl.BlockSpec((3, wcin, wc1), lambda i: (0, 0, 0)),
            pl.BlockSpec((1, wc1), lambda i: (0, 0)),
            pl.BlockSpec((3, wc1, wc2), lambda i: (0, 0, 0)),
            pl.BlockSpec((1, wc2), lambda i: (0, 0)),
        ],
        out_specs=(
            pl.BlockSpec((bt, h, wc1), lambda i: (i, 0, 0)),
            pl.BlockSpec((bt, h, wc2), lambda i: (i, 0, 0)),
        ),
        scratch_shapes=[
            pltpu.VMEM((slab, wcin), jnp.float32),   # H-padded input slab
            pltpu.VMEM((slab, wc1), jnp.float32),    # H-padded ReLU(conv1) slab
        ],
    )

    return pl.pallas_call(
        kernel,
        out_shape=(jax.ShapeDtypeStruct((n_pad, h, wc1), jnp.float32),
                   jax.ShapeDtypeStruct((n_pad, h, wc2), jnp.float32)),
        grid_spec=grid_spec,
        compiler_params=pltpu.CompilerParams(
            dimension_semantics=("parallel",)),
    )(x, w1b, b1t, w2b, b2t)


def _build_banded_weights(w_oihw, width):
    """PyTorch conv weight (Cout, Cin, 3, 3) -> banded (3, W*Cin, W*Cout).

    big[dy, win*Cin+ci, wout*Cout+co] = w[co, ci, dy, dx] with win = wout+dx-1,
    so a single (M, W*Cin) @ big[dy] matmul performs all 3 W-taps of kernel row
    dy at once, with W-direction zero padding implied by the dropped bands.
    (Note: this grows as W^2*Cin*Cout - fine at W=16, revisit for large W.)
    """
    cout, cin, kh, kw = w_oihw.shape
    wt = jnp.transpose(w_oihw, (2, 3, 1, 0))                 # (3, 3, Cin, Cout)
    a = jnp.arange(width)
    sel = (a[None, :, None] == a[None, None, :]
           + jnp.arange(kw)[:, None, None] - 1)              # (3, W, W)
    sel = sel.astype(w_oihw.dtype)
    big6 = jnp.einsum('xab,yxio->yaibo', sel, wt)            # (3, W, Cin, W, Cout)
    return big6.reshape(kh, width * cin, width * cout)


def init_backbone_params(key, cin=4, c1=8, c2=8):
    """Deterministic synthetic weights, PyTorch layout (Cout, Cin, 3, 3)."""
    k1, k2, k3, k4 = jax.random.split(key, 4)
    return {
        "conv1_w": 0.1 * jax.random.normal(k1, (c1, cin, 3, 3), jnp.float32),
        "conv1_b": 0.05 * jax.random.normal(k2, (c1,), jnp.float32),
        "conv2_w": 0.1 * jax.random.normal(k3, (c2, c1, 3, 3), jnp.float32),
        "conv2_b": 0.05 * jax.random.normal(k4, (c2,), jnp.float32),
    }


def prepare_feature_extractor_params(params, width):
    """One-time prep of the static kernel operands (call once, reuse forever).

    Moves the banded-weight einsum and bias tiling out of the per-call path.
    """
    c1 = params["conv1_w"].shape[0]
    c2 = params["conv2_w"].shape[0]
    return {
        "w1b": _build_banded_weights(params["conv1_w"], width),
        "b1t": jnp.tile(params["conv1_b"], (width,)).reshape(1, width * c1),
        "w2b": _build_banded_weights(params["conv2_w"], width),
        "b2t": jnp.tile(params["conv2_b"], (width,)).reshape(1, width * c2),
    }


@jax.jit
def feature_extractor_forward(x_nchw, prepped):
    """Equivalent of FeatureExtractor(model, ["conv1", "conv2"]).forward(x).

    x_nchw : (N, Cin, H, W) float32 (PyTorch NCHW convention).
    prepped: output of prepare_feature_extractor_params (static, built once).
    Returns {"conv1": (N, C1, H, W), "conv2": (N, C2, H, W)} - raw (pre-ReLU)
    outputs of the hooked conv layers, NCHW like the PyTorch hooks capture.
    """
    n, cin, h, w = x_nchw.shape
    wc1 = prepped["b1t"].shape[1]
    wc2 = prepped["b2t"].shape[1]
    c1, c2 = wc1 // w, wc2 // w

    # NCHW -> lane-dense (N, H, W*Cin); the H 'same' padding is done in-kernel.
    x = jnp.transpose(x_nchw, (0, 2, 3, 1)).reshape(n, h, w * cin)

    rows_pad = _round_up(h, 8) + 8
    bt = _choose_batch_tile(n, rows_pad)
    n_pad = _round_up(n, bt)
    if n_pad != n:
        x = jnp.pad(x, ((0, n_pad - n), (0, 0), (0, 0)))

    f1, f2 = _fused_two_layer_conv(x, prepped["w1b"], prepped["b1t"],
                                   prepped["w2b"], prepped["b2t"],
                                   bt=bt, rows_pad=rows_pad)
    f1, f2 = f1[:n], f2[:n]

    # Lane-dense (N, H, W*C) -> NCHW (required by the PyTorch hook semantics).
    f1 = jnp.transpose(f1.reshape(n, h, w, c1), (0, 3, 1, 2))
    f2 = jnp.transpose(f2.reshape(n, h, w, c2), (0, 3, 1, 2))
    return {"conv1": f1, "conv2": f2}


def _reference_forward(x_nchw, params):
    """Pure-JAX reference (lax.conv) for a correctness check."""
    def conv(x, wgt, b):
        y = jax.lax.conv_general_dilated(
            x, wgt, window_strides=(1, 1), padding="SAME",
            dimension_numbers=("NCHW", "OIHW", "NCHW"))
        return y + b[None, :, None, None]

    f1 = conv(x_nchw, params["conv1_w"], params["conv1_b"])
    a1 = jnp.maximum(f1, 0.0)
    f2 = conv(a1, params["conv2_w"], params["conv2_b"])
    return {"conv1": f1, "conv2": f2}


if __name__ == "__main__":
    key = jax.random.PRNGKey(0)
    k_x, k_p = jax.random.split(key)

    # Small shapes consistent with the module: batch=2, channels=4, spatial=16.
    x = jax.random.normal(k_x, (2, 4, 16, 16), jnp.float32)
    params = init_backbone_params(k_p)

    # One-time prep of banded weights / tiled biases (outside the hot path).
    prepped = prepare_feature_extractor_params(params, width=x.shape[3])

    feats = feature_extractor_forward(x, prepped)
    jax.block_until_ready(feats)

    ref = _reference_forward(x, params)
    for name in ("conv1", "conv2"):
        assert feats[name].shape == ref[name].shape
        assert jnp.max(jnp.abs(feats[name] - ref[name])) < 1e-4

    print("KERNEL_OK")
</pallas_src>

<mosaic_0001>
module attributes {stable_mosaic.version = 11 : i64} {
  func.func @kernel(%arg0: i32, %arg1: memref<1x16x64xf32, #tpu.memory_space<vmem>>, %arg2: memref<3x64x128xf32, #tpu.memory_space<vmem>>, %arg3: memref<1x128xf32, #tpu.memory_space<vmem>>, %arg4: memref<3x128x128xf32, #tpu.memory_space<vmem>>, %arg5: memref<1x128xf32, #tpu.memory_space<vmem>>, %arg6: memref<1x16x128xf32, #tpu.memory_space<vmem>>, %arg7: memref<1x16x128xf32, #tpu.memory_space<vmem>>, %arg8: memref<32x64xf32, #tpu.memory_space<vmem>>, %arg9: memref<32x128xf32, #tpu.memory_space<vmem>>) attributes {dimension_semantics = [#tpu.dimension_semantics<parallel>], iteration_bounds = array<i64: 2>, scalar_prefetch = 0 : i64, scratch_operands = 2 : i64, tpu.core_type = #tpu.core_type<tc>, window_params = [{transform_indices = @transform_0, window_bounds = array<i64: 1, 16, 64>}, {pipeline_mode = #tpu.pipeline_mode<synchronous>, transform_indices = @transform_1, window_bounds = array<i64: 3, 64, 128>}, {pipeline_mode = #tpu.pipeline_mode<synchronous>, transform_indices = @transform_2, window_bounds = array<i64: 1, 128>}, {pipeline_mode = #tpu.pipeline_mode<synchronous>, transform_indices = @transform_3, window_bounds = array<i64: 3, 128, 128>}, {pipeline_mode = #tpu.pipeline_mode<synchronous>, transform_indices = @transform_4, window_bounds = array<i64: 1, 128>}, {transform_indices = @transform_5, window_bounds = array<i64: 1, 16, 128>}, {transform_indices = @transform_6, window_bounds = array<i64: 1, 16, 128>}]} {
    %cst = arith.constant 0.000000e+00 : f32
    %0 = vector.broadcast %cst : f32 to vector<8x64xf32>
    %cst_0 = arith.constant 0.000000e+00 : f32
    %1 = vector.broadcast %cst_0 : f32 to vector<8x128xf32>
    %cst_1 = arith.constant 0.000000e+00 : f32
    %2 = vector.broadcast %cst_1 : f32 to vector<8x64xf32>
    %cst_2 = arith.constant 0.000000e+00 : f32
    %3 = vector.broadcast %cst_2 : f32 to vector<8x128xf32>
    %c0 = arith.constant 0 : index
    %c0_3 = arith.constant 0 : index
    %4 = vector.load %arg8[%c0, %c0_3] : memref<32x64xf32, #tpu.memory_space<vmem>>, vector<8x64xf32>
    tpu.vector_store %arg8[%c0, %c0_3], %0 {strides = array<i32>} : memref<32x64xf32, #tpu.memory_space<vmem>>, vector<8x64xf32>,
    %c0_4 = arith.constant 0 : index
    %c0_5 = arith.constant 0 : index
    %5 = vector.load %arg9[%c0_4, %c0_5] : memref<32x128xf32, #tpu.memory_space<vmem>>, vector<8x128xf32>
    tpu.vector_store %arg9[%c0_4, %c0_5], %1 {strides = array<i32>} : memref<32x128xf32, #tpu.memory_space<vmem>>, vector<8x128xf32>,
    %c0_6 = arith.constant 0 : index
    %c0_7 = arith.constant 0 : index
    %c0_8 = arith.constant 0 : index
    %6 = vector.load %arg1[%c0_6, %c0_7, %c0_8] : memref<1x16x64xf32, #tpu.memory_space<vmem>>, vector<1x16x64xf32>
    %7 = vector.shape_cast %6 : vector<1x16x64xf32> to vector<16x64xf32>
    %c8 = arith.constant 8 : index
    %c0_9 = arith.constant 0 : index
    %8 = vector.load %arg8[%c8, %c0_9] : memref<32x64xf32, #tpu.memory_space<vmem>>, vector<16x64xf32>
    tpu.vector_store %arg8[%c8, %c0_9], %7 {strides = array<i32>} : memref<32x64xf32, #tpu.memory_space<vmem>>, vector<16x64xf32>,
    %c24 = arith.constant 24 : index
    %c0_10 = arith.constant 0 : index
    %9 = vector.load %arg8[%c24, %c0_10] : memref<32x64xf32, #tpu.memory_space<vmem>>, vector<8x64xf32>
    tpu.vector_store %arg8[%c24, %c0_10], %2 {strides = array<i32>} : memref<32x64xf32, #tpu.memory_space<vmem>>, vector<8x64xf32>,
    %c24_11 = arith.constant 24 : index
    %c0_12 = arith.constant 0 : index
    %10 = vector.load %arg9[%c24_11, %c0_12] : memref<32x128xf32, #tpu.memory_space<vmem>>, vector<8x128xf32>
    tpu.vector_store %arg9[%c24_11, %c0_12], %3 {strides = array<i32>} : memref<32x128xf32, #tpu.memory_space<vmem>>, vector<8x128xf32>,
    %c0_13 = arith.constant 0 : index
    %c0_14 = arith.constant 0 : index
    %11 = vector.load %arg8[%c0_13, %c0_14] : memref<32x64xf32, #tpu.memory_space<vmem>>, vector<24x64xf32>
    %c0_15 = arith.constant 0 : index
    %c0_16 = arith.constant 0 : index
    %c0_17 = arith.constant 0 : index
    %12 = vector.load %arg2[%c0_15, %c0_16, %c0_17] : memref<3x64x128xf32, #tpu.memory_space<vmem>>, vector<1x64x128xf32>
    %13 = vector.shape_cast %12 : vector<1x64x128xf32> to vector<64x128xf32>
    %cst_18 = arith.constant dense<0.000000e+00> : vector<24x128xf32>
    %14 = tpu.matmul %11, %13, %cst_18 {dimension_numbers = #tpu.dot_dimension_numbers<[1], [0], [0], [1], [0, 0, 1, 1], [], []>} : vector<24x64xf32>, vector<64x128xf32>, vector<24x128xf32> -> vector<24x128xf32>
    %c1 = arith.constant 1 : index
    %c0_19 = arith.constant 0 : index
    %15 = vector.load %arg8[%c1, %c0_19] : memref<32x64xf32, #tpu.memory_space<vmem>>, vector<24x64xf32>
    %c1_20 = arith.constant 1 : index
    %c0_21 = arith.constant 0 : index
    %c0_22 = arith.constant 0 : index
    %16 = vector.load %arg2[%c1_20, %c0_21, %c0_22] : memref<3x64x128xf32, #tpu.memory_space<vmem>>, vector<1x64x128xf32>
    %17 = vector.shape_cast %16 : vector<1x64x128xf32> to vector<64x128xf32>
    %cst_23 = arith.constant dense<0.000000e+00> : vector<24x128xf32>
    %18 = tpu.matmul %15, %17, %cst_23 {dimension_numbers = #tpu.dot_dimension_numbers<[1], [0], [0], [1], [0, 0, 1, 1], [], []>} : vector<24x64xf32>, vector<64x128xf32>, vector<24x128xf32> -> vector<24x128xf32>
    %19 = arith.addf %14, %18 : vector<24x128xf32>
    %c2 = arith.constant 2 : index
    %c0_24 = arith.constant 0 : index
    %20 = vector.load %arg8[%c2, %c0_24] : memref<32x64xf32, #tpu.memory_space<vmem>>, vector<24x64xf32>
    %c2_25 = arith.constant 2 : index
    %c0_26 = arith.constant 0 : index
    %c0_27 = arith.constant 0 : index
    %21 = vector.load %arg2[%c2_25, %c0_26, %c0_27] : memref<3x64x128xf32, #tpu.memory_space<vmem>>, vector<1x64x128xf32>
    %22 = vector.shape_cast %21 : vector<1x64x128xf32> to vector<64x128xf32>
    %cst_28 = arith.constant dense<0.000000e+00> : vector<24x128xf32>
    %23 = tpu.matmul %20, %22, %cst_28 {dimension_numbers = #tpu.dot_dimension_numbers<[1], [0], [0], [1], [0, 0, 1, 1], [], []>} : vector<24x64xf32>, vector<64x128xf32>, vector<24x128xf32> -> vector<24x128xf32>
    %24 = arith.addf %19, %23 : vector<24x128xf32>
    %c0_29 = arith.constant 0 : index
    %c0_30 = arith.constant 0 : index
    %25 = vector.load %arg3[%c0_29, %c0_30] : memref<1x128xf32, #tpu.memory_space<vmem>>, vector<1x128xf32>
    %26 = vector.broadcast %25 : vector<1x128xf32> to vector<24x128xf32>
    %27 = arith.addf %24, %26 : vector<24x128xf32>
    %28 = vector.extract_strided_slice %27 {offsets = [7, 0], sizes = [16, 128], strides = [1, 1]} : vector<24x128xf32> to vector<16x128xf32>
    %c0_31 = arith.constant 0 : index
    %c0_32 = arith.constant 0 : index
    %c0_33 = arith.constant 0 : index
    %29 = vector.load %arg6[%c0_31, %c0_32, %c0_33] : memref<1x16x128xf32, #tpu.memory_space<vmem>>, vector<1x16x128xf32>
    %30 = vector.shape_cast %29 : vector<1x16x128xf32> to vector<16x128xf32>
    %31 = vector.shape_cast %28 : vector<16x128xf32> to vector<1x16x128xf32>
    tpu.vector_store %arg6[%c0_31, %c0_32, %c0_33], %31 {strides = array<i32>} : memref<1x16x128xf32, #tpu.memory_space<vmem>>, vector<1x16x128xf32>,
    %cst_34 = arith.constant 0.000000e+00 : f32
    %32 = vector.broadcast %cst_34 : f32 to vector<16x128xf32>
    %33 = arith.maximumf %28, %32 : vector<16x128xf32>
    %c8_35 = arith.constant 8 : index
    %c0_36 = arith.constant 0 : index
    %34 = vector.load %arg9[%c8_35, %c0_36] : memref<32x128xf32, #tpu.memory_space<vmem>>, vector<16x128xf32>
    tpu.vector_store %arg9[%c8_35, %c0_36], %33 {strides = array<i32>} : memref<32x128xf32, #tpu.memory_space<vmem>>, vector<16x128xf32>,
    %c0_37 = arith.constant 0 : index
    %c0_38 = arith.constant 0 : index
    %35 = vector.load %arg9[%c0_37, %c0_38] : memref<32x128xf32, #tpu.memory_space<vmem>>, vector<24x128xf32>
    %c0_39 = arith.constant 0 : index
    %c0_40 = arith.constant 0 : index
    %c0_41 = arith.constant 0 : index
    %36 = vector.load %arg4[%c0_39, %c0_40, %c0_41] : memref<3x128x128xf32, #tpu.memory_space<vmem>>, vector<1x128x128xf32>
    %37 = vector.shape_cast %36 : vector<1x128x128xf32> to vector<128x128xf32>
    %cst_42 = arith.constant dense<0.000000e+00> : vector<24x128xf32>
    %38 = tpu.matmul %35, %37, %cst_42 {dimension_numbers = #tpu.dot_dimension_numbers<[1], [0], [0], [1], [0, 0, 1, 1], [], []>} : vector<24x128xf32>, vector<128x128xf32>, vector<24x128xf32> -> vector<24x128xf32>
    %c1_43 = arith.constant 1 : index
    %c0_44 = arith.constant 0 : index
    %39 = vector.load %arg9[%c1_43, %c0_44] : memref<32x128xf32, #tpu.memory_space<vmem>>, vector<24x128xf32>
    %c1_45 = arith.constant 1 : index
    %c0_46 = arith.constant 0 : index
    %c0_47 = arith.constant 0 : index
    %40 = vector.load %arg4[%c1_45, %c0_46, %c0_47] : memref<3x128x128xf32, #tpu.memory_space<vmem>>, vector<1x128x128xf32>
    %41 = vector.shape_cast %40 : vector<1x128x128xf32> to vector<128x128xf32>
    %cst_48 = arith.constant dense<0.000000e+00> : vector<24x128xf32>
    %42 = tpu.matmul %39, %41, %cst_48 {dimension_numbers = #tpu.dot_dimension_numbers<[1], [0], [0], [1], [0, 0, 1, 1], [], []>} : vector<24x128xf32>, vector<128x128xf32>, vector<24x128xf32> -> vector<24x128xf32>
    %43 = arith.addf %38, %42 : vector<24x128xf32>
    %c2_49 = arith.constant 2 : index
    %c0_50 = arith.constant 0 : index
    %44 = vector.load %arg9[%c2_49, %c0_50] : memref<32x128xf32, #tpu.memory_space<vmem>>, vector<24x128xf32>
    %c2_51 = arith.constant 2 : index
    %c0_52 = arith.constant 0 : index
    %c0_53 = arith.constant 0 : index
    %45 = vector.load %arg4[%c2_51, %c0_52, %c0_53] : memref<3x128x128xf32, #tpu.memory_space<vmem>>, vector<1x128x128xf32>
    %46 = vector.shape_cast %45 : vector<1x128x128xf32> to vector<128x128xf32>
    %cst_54 = arith.constant dense<0.000000e+00> : vector<24x128xf32>
    %47 = tpu.matmul %44, %46, %cst_54 {dimension_numbers = #tpu.dot_dimension_numbers<[1], [0], [0], [1], [0, 0, 1, 1], [], []>} : vector<24x128xf32>, vector<128x128xf32>, vector<24x128xf32> -> vector<24x128xf32>
    %48 = arith.addf %43, %47 : vector<24x128xf32>
    %c0_55 = arith.constant 0 : index
    %c0_56 = arith.constant 0 : index
    %49 = vector.load %arg5[%c0_55, %c0_56] : memref<1x128xf32, #tpu.memory_space<vmem>>, vector<1x128xf32>
    %50 = vector.broadcast %49 : vector<1x128xf32> to vector<24x128xf32>
    %51 = arith.addf %48, %50 : vector<24x128xf32>
    %52 = vector.extract_strided_slice %51 {offsets = [7, 0], sizes = [16, 128], strides = [1, 1]} : vector<24x128xf32> to vector<16x128xf32>
    %c0_57 = arith.constant 0 : index
    %c0_58 = arith.constant 0 : index
    %c0_59 = arith.constant 0 : index
    %53 = vector.load %arg7[%c0_57, %c0_58, %c0_59] : memref<1x16x128xf32, #tpu.memory_space<vmem>>, vector<1x16x128xf32>
    %54 = vector.shape_cast %53 : vector<1x16x128xf32> to vector<16x128xf32>
    %55 = vector.shape_cast %52 : vector<16x128xf32> to vector<1x16x128xf32>
    tpu.vector_store %arg7[%c0_57, %c0_58, %c0_59], %55 {strides = array<i32>} : memref<1x16x128xf32, #tpu.memory_space<vmem>>, vector<1x16x128xf32>,
    return
  }
  func.func @transform_0(%arg0: i32) -> (i32, i32, i32) {
    %c0_i32 = arith.constant 0 : i32
    %c0_i32_0 = arith.constant 0 : i32
    %c0_i32_1 = arith.constant 0 : i32
    return %arg0, %c0_i32, %c0_i32_0 : i32, i32, i32
  }
  func.func @transform_1(%arg0: i32) -> (i32, i32, i32) {
    %c0_i32 = arith.constant 0 : i32
    %c0_i32_0 = arith.constant 0 : i32
    %c0_i32_1 = arith.constant 0 : i32
    %c0_i32_2 = arith.constant 0 : i32
    return %c0_i32, %c0_i32_0, %c0_i32_1 : i32, i32, i32
  }
  func.func @transform_2(%arg0: i32) -> (i32, i32) {
    %c0_i32 = arith.constant 0 : i32
    %c0_i32_0 = arith.constant 0 : i32
    %c0_i32_1 = arith.constant 0 : i32
    return %c0_i32, %c0_i32_0 : i32, i32
  }
  func.func @transform_3(%arg0: i32) -> (i32, i32, i32) {
    %c0_i32 = arith.constant 0 : i32
    %c0_i32_0 = arith.constant 0 : i32
    %c0_i32_1 = arith.constant 0 : i32
    %c0_i32_2 = arith.constant 0 : i32
    return %c0_i32, %c0_i32_0, %c0_i32_1 : i32, i32, i32
  }
  func.func @transform_4(%arg0: i32) -> (i32, i32) {
    %c0_i32 = arith.constant 0 : i32
    %c0_i32_0 = arith.constant 0 : i32
    %c0_i32_1 = arith.constant 0 : i32
    return %c0_i32, %c0_i32_0 : i32, i32
  }
  func.func @transform_5(%arg0: i32) -> (i32, i32, i32) {
    %c0_i32 = arith.constant 0 : i32
    %c0_i32_0 = arith.constant 0 : i32
    %c0_i32_1 = arith.constant 0 : i32
    return %arg0, %c0_i32, %c0_i32_0 : i32, i32, i32
  }
  func.func @transform_6(%arg0: i32) -> (i32, i32, i32) {
    %c0_i32 = arith.constant 0 : i32
    %c0_i32_0 = arith.constant 0 : i32
    %c0_i32_1 = arith.constant 0 : i32
    return %arg0, %c0_i32, %c0_i32_0 : i32, i32, i32
  }
}

</mosaic_0001>

<llo_original>
// kernel: feature_extractor_forward.1
$region0: #{feature_extractor_forward.1}
  #allocation0 [shape = 'u32[]', space=smem, size = 0x4, offset = 0x4, fixed_abs, tag = 'smem constant byte address 0x4 - core index']
  #allocation1 [shape = 'u32[72,128]{1,0:T(1,128)}', space=vmem, size = 0x9000, scoped, tag = 'internal scratch']
  #allocation2 [shape = 'f32[32,64]{1,0:T(8,128)}', space=vmem, size = 0x4000, scoped, tag = 'scratch operand']
  #allocation3 [shape = 'f32[32,128]{1,0:T(8,128)}', space=vmem, size = 0x4000, scoped, tag = 'scratch operand']
  %s0 = inlined_call_operand.vmem [shape: f32[2,16,64], index: 0, kind: input, shape index: {}]
  %s1 = inlined_call_operand.hbm [shape: f32[3,64,128], index: 1, kind: input, shape index: {}]
  %s2 = inlined_call_operand.vmem [shape: f32[1,128], index: 2, kind: input, shape index: {}]
  %s3 = inlined_call_operand.vmem [shape: f32[3,128,128], index: 3, kind: input, shape index: {}]
  %s4 = inlined_call_operand.vmem [shape: f32[1,128], index: 4, kind: input, shape index: {}]
  %s5 = inlined_call_operand.vmem [shape: f32[2,16,128], index: 5, kind: output, shape index: {0}]
  %s6 = inlined_call_operand.vmem [shape: f32[2,16,128], index: 6, kind: output, shape index: {1}]
  %7 = xla_tuple %s5, %s6
  %s8 = sld [smem:[#allocation0]]
  $region65: #{feature_extractor_forward.1} parent=0
    _
  %s10 = ssub.s32 1, %s8
  %s11 = scalar_select 0, %s10, %s8
  $region1: #{feature_extractor_forward.1} parent=0
    #allocation4 [shape = 'u8[98304]{0}', space=vmem, size = 0x18000, scoped, tag = 'input window, operand 1, single buffered']
    #allocation5 [shape = 's32[2]{0}', space=sflag, size = 0x8, scoped, tag = 'scoped memory for feature_extractor_forward.1']
    %12 = vsyncpa [#allocation5], 0
    loop: start=0, step=1, limit=4
    $region2: #{feature_extractor_forward.1} parent=1 // loop_pre_header
      _
    $region3: #{feature_extractor_forward.1} parent=1 // loop_header
      %s14 = sphi 0, %s18
      %p15 = scmp.ge.s32.totalorder %s14, 4
      %s24 = sphi 0, %s26
      %s27 = sphi 0, %s24
      %s28 = sphi 0, %s27
      %s44 = sphi 0, %s28
      %s48 = sphi 0, %s48
      %s50 = sphi 0, %s48
      %s51 = sphi 0, %s50
      %s65 = sphi 0, %s51
      %s69 = sphi 0, %s69
      %s71 = sphi 0, %s69
      %s72 = sphi 0, %s71
      %s86 = sphi 0, %s72
      %s90 = sphi 0, %s90
      %s92 = sphi 0, %s90
      %s93 = sphi 0, %s92
      %s107 = sphi 0, %s93
      %s111 = sphi 0, %s111
      %s113 = sphi 0, %s111
      %s114 = sphi 0, %s113
      %s128 = sphi 0, %s114
      %s134 = sphi 0, %s136
      %s137 = sphi 0, %s134
      %s138 = sphi 0, %s137
      %s154 = sphi 0, %s138
      %s160 = sphi 0, %s162
      %s163 = sphi 0, %s160
      %s164 = sphi 0, %s163
      %s180 = sphi 0, %s164
    $region4: #{feature_extractor_forward.1} parent=1 // loop_header_branch
      %17 = sbr.rel (%p15) target = $region8
    $region5: #{feature_extractor_forward.1} parent=1 // loop_body
      %s19 = ssub.s32 %s14, 1
      %s20 = ssub.s32 %s14, 2
      %s21 = sadd.s32 %s14, 1
      %s22 = ssub.s32 %s14, %s21
      %p23 = scmp.eq.s32.totalorder %s22, 0
      %s25 = sadd.s32 %s24, 1
      %s26 = scalar_select %p23, %s24, %s25
      %p29 = pneg %p23
      %p30 = scmp.eq.s32.totalorder %s14, 1
      %p31 = por %p29, %p30
      %p32 = scmp.ne.s32.totalorder %s24, %s27
      %p33 = scmp.eq.s32.totalorder %s14, 0
      %p34 = por %p32, %p33
      %p35 = scmp.ne.s32.totalorder %s24, %s27
      %p36 = scmp.eq.s32.totalorder %s19, 1
      %p37 = por %p35, %p36
      %p38 = scmp.ne.s32.totalorder %s27, %s28
      %p39 = scmp.eq.s32.totalorder %s19, 0
      %p40 = por %p38, %p39
      %p41 = scmp.ne.s32.totalorder %s27, %s28
      %p42 = scmp.eq.s32.totalorder %s20, 1
      %p43 = por %p41, %p42
      %p45 = scmp.ne.s32.totalorder %s28, %s44
      %p46 = scmp.eq.s32.totalorder %s20, 0
      %p47 = por %p45, %p46
      %s49 = sadd.s32 %s48, 1
      %p52 = scmp.eq.s32.totalorder %s14, 1
      %p53 = scmp.ne.s32.totalorder %s48, %s50
      %p54 = scmp.eq.s32.totalorder %s14, 0
      %p55 = por %p53, %p54
      %p56 = scmp.ne.s32.totalorder %s48, %s50
      %p57 = scmp.eq.s32.totalorder %s19, 1
      %p58 = por %p56, %p57
      %p59 = scmp.ne.s32.totalorder %s50, %s51
      %p60 = scmp.eq.s32.totalorder %s19, 0
      %p61 = por %p59, %p60
      %p62 = scmp.ne.s32.totalorder %s50, %s51
      %p63 = scmp.eq.s32.totalorder %s20, 1
      %p64 = por %p62, %p63
      %p66 = scmp.ne.s32.totalorder %s51, %s65
      %p67 = scmp.eq.s32.totalorder %s20, 0
      %p68 = por %p66, %p67
      %s70 = sadd.s32 %s69, 1
      %p73 = scmp.eq.s32.totalorder %s14, 1
      %p74 = scmp.ne.s32.totalorder %s69, %s71
      %p75 = scmp.eq.s32.totalorder %s14, 0
      %p76 = por %p74, %p75
      %p77 = scmp.ne.s32.totalorder %s69, %s71
      %p78 = scmp.eq.s32.totalorder %s19, 1
      %p79 = por %p77, %p78
      %p80 = scmp.ne.s32.totalorder %s71, %s72
      %p81 = scmp.eq.s32.totalorder %s19, 0
      %p82 = por %p80, %p81
      %p83 = scmp.ne.s32.totalorder %s71, %s72
      %p84 = scmp.eq.s32.totalorder %s20, 1
      %p85 = por %p83, %p84
      %p87 = scmp.ne.s32.totalorder %s72, %s86
      %p88 = scmp.eq.s32.totalorder %s20, 0
      %p89 = por %p87, %p88
      %s91 = sadd.s32 %s90, 1
      %p94 = scmp.eq.s32.totalorder %s14, 1
      %p95 = scmp.ne.s32.totalorder %s90, %s92
      %p96 = scmp.eq.s32.totalorder %s14, 0
      %p97 = por %p95, %p96
      %p98 = scmp.ne.s32.totalorder %s90, %s92
      %p99 = scmp.eq.s32.totalorder %s19, 1
      %p100 = por %p98, %p99
      %p101 = scmp.ne.s32.totalorder %s92, %s93
      %p102 = scmp.eq.s32.totalorder %s19, 0
      %p103 = por %p101, %p102
      %p104 = scmp.ne.s32.totalorder %s92, %s93
      %p105 = scmp.eq.s32.totalorder %s20, 1
      %p106 = por %p104, %p105
      %p108 = scmp.ne.s32.totalorder %s93, %s107
      %p109 = scmp.eq.s32.totalorder %s20, 0
      %p110 = por %p108, %p109
      %s112 = sadd.s32 %s111, 1
      %p115 = scmp.eq.s32.totalorder %s14, 1
      %p116 = scmp.ne.s32.totalorder %s111, %s113
      %p117 = scmp.eq.s32.totalorder %s14, 0
      %p118 = por %p116, %p117
      %p119 = scmp.ne.s32.totalorder %s111, %s113
      %p120 = scmp.eq.s32.totalorder %s19, 1
      %p121 = por %p119, %p120
      %p122 = scmp.ne.s32.totalorder %s113, %s114
      %p123 = scmp.eq.s32.totalorder %s19, 0
      %p124 = por %p122, %p123
      %p125 = scmp.ne.s32.totalorder %s113, %s114
      %p126 = scmp.eq.s32.totalorder %s20, 1
      %p127 = por %p125, %p126
      %p129 = scmp.ne.s32.totalorder %s114, %s128
      %p130 = scmp.eq.s32.totalorder %s20, 0
      %p131 = por %p129, %p130
      %s132 = ssub.s32 %s14, %s21
      %p133 = scmp.eq.s32.totalorder %s132, 0
      %s135 = sadd.s32 %s134, 1
      %s136 = scalar_select %p133, %s134, %s135
      %p139 = pneg %p133
      %p140 = scmp.eq.s32.totalorder %s14, 1
      %p141 = por %p139, %p140
      %p142 = scmp.ne.s32.totalorder %s134, %s137
      %p143 = scmp.eq.s32.totalorder %s14, 0
      %p144 = por %p142, %p143
      %p145 = scmp.ne.s32.totalorder %s134, %s137
      %p146 = scmp.eq.s32.totalorder %s19, 1
      %p147 = por %p145, %p146
      %p148 = scmp.ne.s32.totalorder %s137, %s138
      %p149 = scmp.eq.s32.totalorder %s19, 0
      %p150 = por %p148, %p149
      %p151 = scmp.ne.s32.totalorder %s137, %s138
      %p152 = scmp.eq.s32.totalorder %s20, 1
      %p153 = por %p151, %p152
      %p155 = scmp.ne.s32.totalorder %s138, %s154
      %p156 = scmp.eq.s32.totalorder %s20, 0
      %p157 = por %p155, %p156
      %s158 = ssub.s32 %s14, %s21
      %p159 = scmp.eq.s32.totalorder %s158, 0
      %s161 = sadd.s32 %s160, 1
      %s162 = scalar_select %p159, %s160, %s161
      %p165 = pneg %p159
      %p166 = scmp.eq.s32.totalorder %s14, 1
      %p167 = por %p165, %p166
      %p168 = scmp.ne.s32.totalorder %s160, %s163
      %p169 = scmp.eq.s32.totalorder %s14, 0
      %p170 = por %p168, %p169
      %p171 = scmp.ne.s32.totalorder %s160, %s163
      %p172 = scmp.eq.s32.totalorder %s19, 1
      %p173 = por %p171, %p172
      %p174 = scmp.ne.s32.totalorder %s163, %s164
      %p175 = scmp.eq.s32.totalorder %s19, 0
      %p176 = por %p174, %p175
      %p177 = scmp.ne.s32.totalorder %s163, %s164
      %p178 = scmp.eq.s32.totalorder %s20, 1
      %p179 = por %p177, %p178
      %p181 = scmp.ne.s32.totalorder %s164, %s180
      %p182 = scmp.eq.s32.totalorder %s20, 0
      %p183 = por %p181, %p182
      %p184 = scmp.le.s32.totalorder 1, %s14
      %p185 = scmp.lt.s32.totalorder %s14, 3
      %p186 = pnand %p184, %p185
      %p187 = pneg %p186
      // Predicated region
      $region9: #{feature_extractor_forward.1} parent=5 // pred_check
        _
      $region10: #{feature_extractor_forward.1} parent=5 // pred_check_branch
        %189 = sbr.rel (%p186) target = $region12
      $region11: #{feature_extractor_forward.1} parent=5 // pred_region
        %s190 = ssub.s32 %s14, 1
        // Predicated region
        $region13: #{feature_extractor_forward.1} parent=11 // pred_check
          %p191 = pneg %p61
        $region14: #{feature_extractor_forward.1} parent=11 // pred_check_branch
          %193 = sbr.rel (%p191) target = $region16
        $region15: #{feature_extractor_forward.1} parent=11 // pred_region
          %195 = vsyncadd [#allocation5], 0
          %s196 = sshll.u32 %s1, 4
          %s197 = int_to_ptr.hbm [resolvable:$true] %s196
          %s198 = sshll.u32 [#allocation4], 4
          %s199 = int_to_ptr.vmem [resolvable:$true] %s198
          %204 = dma.hbm_to_vmem [thread:$0]  %s197, 3072, %s199, [#allocation5], 128, 128, 8
        $region16: #{feature_extractor_forward.1} parent=11 // pred_fallthru
          _
        // Predicated region
        $region17: #{feature_extractor_forward.1} parent=11 // pred_check
          %p205 = pneg %p82
        $region18: #{feature_extractor_forward.1} parent=11 // pred_check_branch
          %207 = sbr.rel (%p205) target = $region20
        $region19: #{feature_extractor_forward.1} parent=11 // pred_region
          _
        $region20: #{feature_extractor_forward.1} parent=11 // pred_fallthru
          _
        // Predicated region
        $region21: #{feature_extractor_forward.1} parent=11 // pred_check
          %p208 = pneg %p103
        $region22: #{feature_extractor_forward.1} parent=11 // pred_check_branch
          %210 = sbr.rel (%p208) target = $region24
        $region23: #{feature_extractor_forward.1} parent=11 // pred_region
          _
        $region24: #{feature_extractor_forward.1} parent=11 // pred_fallthru
          _
        // Predicated region
        $region25: #{feature_extractor_forward.1} parent=11 // pred_check
          %p211 = pneg %p124
        $region26: #{feature_extractor_forward.1} parent=11 // pred_check_branch
          %213 = sbr.rel (%p211) target = $region28
        $region27: #{feature_extractor_forward.1} parent=11 // pred_region
          _
        $region28: #{feature_extractor_forward.1} parent=11 // pred_fallthru
          _
      $region12: #{feature_extractor_forward.1} parent=5 // pred_fallthru
        _
      %p214 = scmp.lt.s32.totalorder %s14, 2
      // Predicated region
      $region29: #{feature_extractor_forward.1} parent=5 // pred_check
        %p215 = pneg %p214
      $region30: #{feature_extractor_forward.1} parent=5 // pred_check_branch
        %217 = sbr.rel (%p215) target = $region32
      $region31: #{feature_extractor_forward.1} parent=5 // pred_region
        // Predicated region
        $region33: #{feature_extractor_forward.1} parent=31 // pred_check
          %p218 = pneg %p34
        $region34: #{feature_extractor_forward.1} parent=31 // pred_check_branch
          %220 = sbr.rel (%p218) target = $region36
        $region35: #{feature_extractor_forward.1} parent=31 // pred_region
          %p221 = scmp.lt.s32.totalorder %s14, 1
          %s222 = scalar_select %p221, %s14, 1
          %s223 = smul.addr %s222, 2
          %s224 = smul.addr %s223, 8
          %s225 = scalar_lea.vmem %s0, %s224
        $region36: #{feature_extractor_forward.1} parent=31 // pred_fallthru
          _
      $region32: #{feature_extractor_forward.1} parent=5 // pred_fallthru
        _
      %p226 = scmp.le.s32.totalorder 1, %s14
      %p227 = scmp.lt.s32.totalorder %s14, 3
      %p228 = pnand %p226, %p227
      %p229 = pneg %p228
      // Predicated region
      $region37: #{feature_extractor_forward.1} parent=5 // pred_check
        _
      $region38: #{feature_extractor_forward.1} parent=5 // pred_check_branch
        %231 = sbr.rel (%p228) target = $region40
      $region39: #{feature_extractor_forward.1} parent=5 // pred_region
        %s232 = ssub.s32 %s14, 1
        // Predicated region
        $region41: #{feature_extractor_forward.1} parent=39 // pred_check
          %p233 = pneg %p61
        $region42: #{feature_extractor_forward.1} parent=39 // pred_check_branch
          %235 = sbr.rel (%p233) target = $region44
        $region43: #{feature_extractor_forward.1} parent=39 // pred_region
          %237 = dma.done [#allocation5], 3072
        $region44: #{feature_extractor_forward.1} parent=39 // pred_fallthru
          _
        %p238 = scmp.lt.s32.totalorder %s19, 1
        %s239 = scalar_select %p238, %s19, 1
        %s240 = smul.addr %s239, 2
        %s241 = smul.addr %s240, 8
        %s242 = scalar_lea.vmem %s0, %s241
        %p243 = pneg %p40
        %p244 = pneg %p37
        %p245 = pneg %p61
        %p246 = pneg %p58
        %p247 = pneg %p82
        %p248 = pneg %p79
        %p249 = pneg %p103
        %p250 = pneg %p100
        %p251 = pneg %p124
        %p252 = pneg %p121
        %p253 = pneg %p150
        %p254 = pneg %p147
        %p255 = scmp.lt.s32.totalorder %s19, 1
        %s256 = scalar_select %p255, %s19, 1
        %s257 = smul.addr %s256, 2
        %s258 = smul.addr %s257, 8
        %s259 = scalar_lea.vmem %s5, %s258
        %p260 = pneg %p176
        %p261 = pneg %p173
        %p262 = scmp.lt.s32.totalorder %s19, 1
        %s263 = scalar_select %p262, %s19, 1
        %s264 = smul.addr %s263, 2
        %s265 = smul.addr %s264, 8
        %s266 = scalar_lea.vmem %s6, %s265
        %p267 = scmp.lt.s32.totalorder %s19, 1
        %s268 = scalar_select %p267, %s19, 1
        %s269 = smul.addr %s268, 2
        %s270 = smul.addr %s269, 8
        %s271 = scalar_lea.vmem %s0, %s270
        %p272 = scmp.lt.s32.totalorder %s19, 1
        %s273 = scalar_select %p272, %s19, 1
        %s274 = smul.addr %s273, 2
        %s275 = smul.addr %s274, 8
        %s276 = scalar_lea.vmem %s5, %s275
        %p277 = scmp.lt.s32.totalorder %s19, 1
        %s278 = scalar_select %p277, %s19, 1
        %s279 = smul.addr %s278, 2
        %s280 = smul.addr %s279, 8
        %s281 = scalar_lea.vmem %s6, %s280
        %vm282 = vcmask 523264
        %283 = vst.msk [vmem:[#allocation2] sm:$0xff] %vm282, 0.0
        %284 = vst [vmem:[#allocation3] sm:$0xff] 0.0
        %v285 = vld [vmem:[%s271] sm:$0xff]
        %v286 = vld [vmem:[%s271 + $0x8] sm:$0xff]
        %287 = vst.msk [vmem:[#allocation2 + $0x8] sm:$0xff] %vm282, %v285
        %288 = vst.msk [vmem:[#allocation2 + $0x10] sm:$0xff] %vm282, %v286
        %289 = vst.msk [vmem:[#allocation2 + $0x18] sm:$0xff] %vm282, 0.0
        %290 = vst [vmem:[#allocation3 + $0x18] sm:$0xff] 0.0
        %v291 = vld [vmem:[#allocation2] sm:$0xff]
        %v292 = vld [vmem:[#allocation2 + $0x8] sm:$0xff]
        %v293 = vld [vmem:[#allocation2 + $0x10] sm:$0xff]
        %v294 = vld [vmem:[#allocation4] sm:$0xff]
        %v295 = vld [vmem:[#allocation4 + $0x8] sm:$0xff]
        %v296 = vld [vmem:[#allocation4 + $0x10] sm:$0xff]
        %v297 = vld [vmem:[#allocation4 + $0x18] sm:$0xff]
        %v298 = vld [vmem:[#allocation4 + $0x20] sm:$0xff]
        %v299 = vld [vmem:[#allocation4 + $0x28] sm:$0xff]
        %v300 = vld [vmem:[#allocation4 + $0x30] sm:$0xff]
        %v301 = vld [vmem:[#allocation4 + $0x38] sm:$0xff]
        %v302 = vld [vmem:[#allocation2 + $0x1] sm:$0xff]
        %v303 = vld [vmem:[#allocation2 + $0x9] sm:$0xff]
        %v304 = vld [vmem:[#allocation2 + $0x11] sm:$0xff]
        %s305 = scalar_lea.vmem [#allocation4], 64
        %v306 = vld [vmem:[%s305] sm:$0xff]
        %v307 = vld [vmem:[%s305 + $0x8] sm:$0xff]
        %v308 = vld [vmem:[%s305 + $0x10] sm:$0xff]
        %v309 = vld [vmem:[%s305 + $0x18] sm:$0xff]
        %v310 = vld [vmem:[%s305 + $0x20] sm:$0xff]
        %v311 = vld [vmem:[%s305 + $0x28] sm:$0xff]
        %v312 = vld [vmem:[%s305 + $0x30] sm:$0xff]
        %v313 = vld [vmem:[%s305 + $0x38] sm:$0xff]
        %v315 = vsel %vm282, %v302, 0
        %v318 = vsel %vm282, %v303, 0
        %v321 = vsel %vm282, %v304, 0
        %323 = vmatpush.msra.mxu0 0.0
        %324 = vmatpush.msra.mxu0 0.0
        %325 = vmatpush.msra.mxu0 0.0
        %326 = vmatpush.msra.mxu0 0.0
        %327 = vmatpush.msra.mxu0 0.0
        %328 = vmatpush.msra.mxu0 0.0
        %329 = vmatpush.msra.mxu0 0.0
        %330 = vmatpush.msra.mxu0 0.0
        %331 = vmatpush.msra.mxu0 %v313
        %332 = vmatpush.msra.mxu0 %v312
        %333 = vmatpush.msra.mxu0 %v311
        %334 = vmatpush.msra.mxu0 %v310
        %335 = vmatpush.msra.mxu0 %v309
        %336 = vmatpush.msra.mxu0 %v308
        %337 = vmatpush.msra.mxu0 %v307
        %338 = vmatpush.msra.mxu0 %v306
        %339 = vmatmul.f32.gmra.mxu0 %v315
        %v340 = vpop.f32.mrf.mxu0
        %v341 = vadd.f32 0.0, %v340
        %342 = vmatmul.f32.gmra.mxu0 %v318
        %v343 = vpop.f32.mrf.mxu0
        %v344 = vadd.f32 0.0, %v343
        %345 = vmatmul.f32.gmra.mxu0 %v321
        %v346 = vpop.f32.mrf.mxu0
        %v347 = vadd.f32 0.0, %v346
        %348 = vdwg.mxu0
        %v350 = vsel %vm282, %v291, 0
        %v353 = vsel %vm282, %v292, 0
        %v356 = vsel %vm282, %v293, 0
        %358 = vmatpush.msra.mxu0 0.0
        %359 = vmatpush.msra.mxu0 0.0
        %360 = vmatpush.msra.mxu0 0.0
        %361 = vmatpush.msra.mxu0 0.0
        %362 = vmatpush.msra.mxu0 0.0
        %363 = vmatpush.msra.mxu0 0.0
        %364 = vmatpush.msra.mxu0 0.0
        %365 = vmatpush.msra.mxu0 0.0
        %366 = vmatpush.msra.mxu0 %v301
        %367 = vmatpush.msra.mxu0 %v300
        %368 = vmatpush.msra.mxu0 %v299
        %369 = vmatpush.msra.mxu0 %v298
        %370 = vmatpush.msra.mxu0 %v297
        %371 = vmatpush.msra.mxu0 %v296
        %372 = vmatpush.msra.mxu0 %v295
        %373 = vmatpush.msra.mxu0 %v294
        %374 = vmatmul.f32.gmra.mxu0 %v350
        %v375 = vpop.f32.mrf.mxu0
        %v376 = vadd.f32 %v341, %v375
        %377 = vmatmul.f32.gmra.mxu0 %v353
        %v378 = vpop.f32.mrf.mxu0
        %v379 = vadd.f32 %v344, %v378
        %380 = vmatmul.f32.gmra.mxu0 %v356
        %v381 = vpop.f32.mrf.mxu0
        %v382 = vadd.f32 %v347, %v381
        %383 = vdwg.mxu0
        %v384 = vld [vmem:[#allocation2 + $0x2] sm:$0xff]
        %v385 = vld [vmem:[#allocation2 + $0xa] sm:$0xff]
        %v386 = vld [vmem:[#allocation2 + $0x12] sm:$0xff]
        %s387 = scalar_lea.vmem [#allocation4], 128
        %v388 = vld [vmem:[%s387] sm:$0xff]
        %v389 = vld [vmem:[%s387 + $0x8] sm:$0xff]
        %v390 = vld [vmem:[%s387 + $0x10] sm:$0xff]
        %v391 = vld [vmem:[%s387 + $0x18] sm:$0xff]
        %v392 = vld [vmem:[%s387 + $0x20] sm:$0xff]
        %v393 = vld [vmem:[%s387 + $0x28] sm:$0xff]
        %v394 = vld [vmem:[%s387 + $0x30] sm:$0xff]
        %v395 = vld [vmem:[%s387 + $0x38] sm:$0xff]
        %v397 = vsel %vm282, %v384, 0
        %v400 = vsel %vm282, %v385, 0
        %v403 = vsel %vm282, %v386, 0
        %405 = vmatpush.msra.mxu0 0.0
        %406 = vmatpush.msra.mxu0 0.0
        %407 = vmatpush.msra.mxu0 0.0
        %408 = vmatpush.msra.mxu0 0.0
        %409 = vmatpush.msra.mxu0 0.0
        %410 = vmatpush.msra.mxu0 0.0
        %411 = vmatpush.msra.mxu0 0.0
        %412 = vmatpush.msra.mxu0 0.0
        %413 = vmatpush.msra.mxu0 %v395
        %414 = vmatpush.msra.mxu0 %v394
        %415 = vmatpush.msra.mxu0 %v393
        %416 = vmatpush.msra.mxu0 %v392
        %417 = vmatpush.msra.mxu0 %v391
        %418 = vmatpush.msra.mxu0 %v390
        %419 = vmatpush.msra.mxu0 %v389
        %420 = vmatpush.msra.mxu0 %v388
        %421 = vmatmul.f32.gmra.mxu0 %v397
        %v422 = vpop.f32.mrf.mxu0
        %v423 = vadd.f32 0.0, %v422
        %424 = vmatmul.f32.gmra.mxu0 %v400
        %v425 = vpop.f32.mrf.mxu0
        %v426 = vadd.f32 0.0, %v425
        %427 = vmatmul.f32.gmra.mxu0 %v403
        %v428 = vpop.f32.mrf.mxu0
        %v429 = vadd.f32 0.0, %v428
        %430 = vdwg.mxu0
        %v431 = vadd.f32 %v376, %v423
        %v432 = vadd.f32 %v379, %v426
        %v433 = vadd.f32 %v382, %v429
        %v434 = vld [vmem:[%s2] sm:$0x1]
        %v436 = vperm.slane %v434, 0
        %v438 = vadd.f32 %v431, %v436
        %v439 = vadd.f32 %v432, %v436
        %v440 = vadd.f32 %v433, %v436
        %441 = vst [vmem:[%s276 - $0x7] sm:$0x80] %v438
        %442 = vst [vmem:[%s276 + $0x1] sm:$0xff] %v439
        %443 = vst [vmem:[%s276 + $0x9] sm:$0x7f] %v440
        %v444 = vmax.f32 %v438, 0.0
        %v445 = vmax.f32 %v439, 0.0
        %v446 = vmax.f32 %v440, 0.0
        %447 = vst [vmem:[#allocation3 + $0x1] sm:$0x80] %v444
        %448 = vst [vmem:[#allocation3 + $0x9] sm:$0xff] %v445
        %449 = vst [vmem:[#allocation3 + $0x11] sm:$0x7f] %v446
        %v450 = vld [vmem:[#allocation3] sm:$0xff]
        %v451 = vld [vmem:[#allocation3 + $0x8] sm:$0xff]
        %v452 = vld [vmem:[#allocation3 + $0x10] sm:$0xff]
        %v453 = vld [vmem:[%s3] sm:$0xff]
        %v454 = vld [vmem:[%s3 + $0x8] sm:$0xff]
        %v455 = vld [vmem:[%s3 + $0x10] sm:$0xff]
        %v456 = vld [vmem:[%s3 + $0x18] sm:$0xff]
        %v457 = vld [vmem:[%s3 + $0x20] sm:$0xff]
        %v458 = vld [vmem:[%s3 + $0x28] sm:$0xff]
        %v459 = vld [vmem:[%s3 + $0x30] sm:$0xff]
        %v460 = vld [vmem:[%s3 + $0x38] sm:$0xff]
        %v461 = vld [vmem:[%s3 + $0x40] sm:$0xff]
        %v462 = vld [vmem:[%s3 + $0x48] sm:$0xff]
        %v463 = vld [vmem:[%s3 + $0x50] sm:$0xff]
        %v464 = vld [vmem:[%s3 + $0x58] sm:$0xff]
        %v465 = vld [vmem:[%s3 + $0x60] sm:$0xff]
        %v466 = vld [vmem:[%s3 + $0x68] sm:$0xff]
        %v467 = vld [vmem:[%s3 + $0x70] sm:$0xff]
        %v468 = vld [vmem:[%s3 + $0x78] sm:$0xff]
        %v469 = vld [vmem:[#allocation3 + $0x1] sm:$0xff]
        %v470 = vld [vmem:[#allocation3 + $0x9] sm:$0xff]
        %v471 = vld [vmem:[#allocation3 + $0x11] sm:$0xff]
        %s472 = scalar_lea.vmem %s3, 128
        %v473 = vld [vmem:[%s472] sm:$0xff]
        %v474 = vld [vmem:[%s472 + $0x8] sm:$0xff]
        %v475 = vld [vmem:[%s472 + $0x10] sm:$0xff]
        %v476 = vld [vmem:[%s472 + $0x18] sm:$0xff]
        %v477 = vld [vmem:[%s472 + $0x20] sm:$0xff]
        %v478 = vld [vmem:[%s472 + $0x28] sm:$0xff]
        %v479 = vld [vmem:[%s472 + $0x30] sm:$0xff]
        %v480 = vld [vmem:[%s472 + $0x38] sm:$0xff]
        %v481 = vld [vmem:[%s472 + $0x40] sm:$0xff]
        %v482 = vld [vmem:[%s472 + $0x48] sm:$0xff]
        %v483 = vld [vmem:[%s472 + $0x50] sm:$0xff]
        %v484 = vld [vmem:[%s472 + $0x58] sm:$0xff]
        %v485 = vld [vmem:[%s472 + $0x60] sm:$0xff]
        %v486 = vld [vmem:[%s472 + $0x68] sm:$0xff]
        %v487 = vld [vmem:[%s472 + $0x70] sm:$0xff]
        %v488 = vld [vmem:[%s472 + $0x78] sm:$0xff]
        %489 = vmatpush.msra.mxu0 %v488
        %490 = vmatpush.msra.mxu0 %v487
        %491 = vmatpush.msra.mxu0 %v486
        %492 = vmatpush.msra.mxu0 %v485
        %493 = vmatpush.msra.mxu0 %v484
        %494 = vmatpush.msra.mxu0 %v483
        %495 = vmatpush.msra.mxu0 %v482
        %496 = vmatpush.msra.mxu0 %v481
        %497 = vmatpush.msra.mxu0 %v480
        %498 = vmatpush.msra.mxu0 %v479
        %499 = vmatpush.msra.mxu0 %v478
        %500 = vmatpush.msra.mxu0 %v477
        %501 = vmatpush.msra.mxu0 %v476
        %502 = vmatpush.msra.mxu0 %v475
        %503 = vmatpush.msra.mxu0 %v474
        %504 = vmatpush.msra.mxu0 %v473
        %505 = vmatmul.f32.gmra.mxu0 %v469
        %v506 = vpop.f32.mrf.mxu0
        %v507 = vadd.f32 0.0, %v506
        %508 = vmatmul.f32.gmra.mxu0 %v470
        %v509 = vpop.f32.mrf.mxu0
        %v510 = vadd.f32 0.0, %v509
        %511 = vmatmul.f32.gmra.mxu0 %v471
        %v512 = vpop.f32.mrf.mxu0
        %v513 = vadd.f32 0.0, %v512
        %514 = vdwg.mxu0
        %515 = vmatpush.msra.mxu0 %v468
        %516 = vmatpush.msra.mxu0 %v467
        %517 = vmatpush.msra.mxu0 %v466
        %518 = vmatpush.msra.mxu0 %v465
        %519 = vmatpush.msra.mxu0 %v464
        %520 = vmatpush.msra.mxu0 %v463
        %521 = vmatpush.msra.mxu0 %v462
        %522 = vmatpush.msra.mxu0 %v461
        %523 = vmatpush.msra.mxu0 %v460
        %524 = vmatpush.msra.mxu0 %v459
        %525 = vmatpush.msra.mxu0 %v458
        %526 = vmatpush.msra.mxu0 %v457
        %527 = vmatpush.msra.mxu0 %v456
        %528 = vmatpush.msra.mxu0 %v455
        %529 = vmatpush.msra.mxu0 %v454
        %530 = vmatpush.msra.mxu0 %v453
        %531 = vmatmul.f32.gmra.mxu0 %v450
        %v532 = vpop.f32.mrf.mxu0
        %v533 = vadd.f32 %v507, %v532
        %534 = vmatmul.f32.gmra.mxu0 %v451
        %v535 = vpop.f32.mrf.mxu0
        %v536 = vadd.f32 %v510, %v535
        %537 = vmatmul.f32.gmra.mxu0 %v452
        %v538 = vpop.f32.mrf.mxu0
        %v539 = vadd.f32 %v513, %v538
        %540 = vdwg.mxu0
        %v541 = vld [vmem:[#allocation3 + $0x2] sm:$0xff]
        %v542 = vld [vmem:[#allocation3 + $0xa] sm:$0xff]
        %v543 = vld [vmem:[#allocation3 + $0x12] sm:$0xff]
        %s544 = scalar_lea.vmem %s3, 256
        %v545 = vld [vmem:[%s544] sm:$0xff]
        %v546 = vld [vmem:[%s544 + $0x8] sm:$0xff]
        %v547 = vld [vmem:[%s544 + $0x10] sm:$0xff]
        %v548 = vld [vmem:[%s544 + $0x18] sm:$0xff]
        %v549 = vld [vmem:[%s544 + $0x20] sm:$0xff]
        %v550 = vld [vmem:[%s544 + $0x28] sm:$0xff]
        %v551 = vld [vmem:[%s544 + $0x30] sm:$0xff]
        %v552 = vld [vmem:[%s544 + $0x38] sm:$0xff]
        %v553 = vld [vmem:[%s544 + $0x40] sm:$0xff]
        %v554 = vld [vmem:[%s544 + $0x48] sm:$0xff]
        %v555 = vld [vmem:[%s544 + $0x50] sm:$0xff]
        %v556 = vld [vmem:[%s544 + $0x58] sm:$0xff]
        %v557 = vld [vmem:[%s544 + $0x60] sm:$0xff]
        %v558 = vld [vmem:[%s544 + $0x68] sm:$0xff]
        %v559 = vld [vmem:[%s544 + $0x70] sm:$0xff]
        %v560 = vld [vmem:[%s544 + $0x78] sm:$0xff]
        %561 = vmatpush.msra.mxu0 %v560
        %562 = vmatpush.msra.mxu0 %v559
        %563 = vmatpush.msra.mxu0 %v558
        %564 = vmatpush.msra.mxu0 %v557
        %565 = vmatpush.msra.mxu0 %v556
        %566 = vmatpush.msra.mxu0 %v555
        %567 = vmatpush.msra.mxu0 %v554
        %568 = vmatpush.msra.mxu0 %v553
        %569 = vmatpush.msra.mxu0 %v552
        %570 = vmatpush.msra.mxu0 %v551
        %571 = vmatpush.msra.mxu0 %v550
        %572 = vmatpush.msra.mxu0 %v549
        %573 = vmatpush.msra.mxu0 %v548
        %574 = vmatpush.msra.mxu0 %v547
        %575 = vmatpush.msra.mxu0 %v546
        %576 = vmatpush.msra.mxu0 %v545
        %577 = vmatmul.f32.gmra.mxu0 %v541
        %v578 = vpop.f32.mrf.mxu0
        %v579 = vadd.f32 0.0, %v578
        %580 = vmatmul.f32.gmra.mxu0 %v542
        %v581 = vpop.f32.mrf.mxu0
        %v582 = vadd.f32 0.0, %v581
        %583 = vmatmul.f32.gmra.mxu0 %v543
        %v584 = vpop.f32.mrf.mxu0
        %v585 = vadd.f32 0.0, %v584
        %586 = vdwg.mxu0
        %v587 = vadd.f32 %v533, %v579
        %v588 = vadd.f32 %v536, %v582
        %v589 = vadd.f32 %v539, %v585
        %v590 = vld [vmem:[%s4] sm:$0x1]
        %v592 = vperm.slane %v590, 0
        %v594 = vadd.f32 %v587, %v592
        %v595 = vadd.f32 %v588, %v592
        %v596 = vadd.f32 %v589, %v592
        %597 = vst [vmem:[%s281 - $0x7] sm:$0x80] %v594
        %598 = vst [vmem:[%s281 + $0x1] sm:$0xff] %v595
        %599 = vst [vmem:[%s281 + $0x9] sm:$0x7f] %v596
        %p600 = scmp.lt.s32.totalorder %s19, 1
        %s601 = scalar_select %p600, %s19, 1
        %s602 = smul.addr %s601, 2
        %s603 = smul.addr %s602, 8
        %s604 = scalar_lea.vmem %s5, %s603
        %p605 = scmp.lt.s32.totalorder %s19, 1
        %s606 = scalar_select %p605, %s19, 1
        %s607 = smul.addr %s606, 2
        %s608 = smul.addr %s607, 8
        %s609 = scalar_lea.vmem %s6, %s608
        // Predicated region
        $region45: #{feature_extractor_forward.1} parent=39 // pred_check
          %p610 = pneg %p147
        $region46: #{feature_extractor_forward.1} parent=39 // pred_check_branch
          %612 = sbr.rel (%p610) target = $region48
        $region47: #{feature_extractor_forward.1} parent=39 // pred_region
          _
        $region48: #{feature_extractor_forward.1} parent=39 // pred_fallthru
          _
        // Predicated region
        $region49: #{feature_extractor_forward.1} parent=39 // pred_check
          %p613 = pneg %p173
        $region50: #{feature_extractor_forward.1} parent=39 // pred_check_branch
          %615 = sbr.rel (%p613) target = $region52
        $region51: #{feature_extractor_forward.1} parent=39 // pred_region
          _
        $region52: #{feature_extractor_forward.1} parent=39 // pred_fallthru
          _
      $region40: #{feature_extractor_forward.1} parent=5 // pred_fallthru
        _
      %p616 = scmp.le.s32.totalorder 2, %s14
      // Predicated region
      $region53: #{feature_extractor_forward.1} parent=5 // pred_check
        %p617 = pneg %p616
      $region54: #{feature_extractor_forward.1} parent=5 // pred_check_branch
        %619 = sbr.rel (%p617) target = $region56
      $region55: #{feature_extractor_forward.1} parent=5 // pred_region
        %s620 = ssub.s32 %s14, 2
        // Predicated region
        $region57: #{feature_extractor_forward.1} parent=55 // pred_check
          %p621 = pneg %p153
        $region58: #{feature_extractor_forward.1} parent=55 // pred_check_branch
          %623 = sbr.rel (%p621) target = $region60
        $region59: #{feature_extractor_forward.1} parent=55 // pred_region
          %p624 = scmp.lt.s32.totalorder %s20, 1
          %s625 = scalar_select %p624, %s20, 1
          %s626 = smul.addr %s625, 2
          %s627 = smul.addr %s626, 8
          %s628 = scalar_lea.vmem %s5, %s627
        $region60: #{feature_extractor_forward.1} parent=55 // pred_fallthru
          _
        // Predicated region
        $region61: #{feature_extractor_forward.1} parent=55 // pred_check
          %p629 = pneg %p179
        $region62: #{feature_extractor_forward.1} parent=55 // pred_check_branch
          %631 = sbr.rel (%p629) target = $region64
        $region63: #{feature_extractor_forward.1} parent=55 // pred_region
          %p632 = scmp.lt.s32.totalorder %s20, 1
          %s633 = scalar_select %p632, %s20, 1
          %s634 = smul.addr %s633, 2
          %s635 = smul.addr %s634, 8
          %s636 = scalar_lea.vmem %s6, %s635
        $region64: #{feature_extractor_forward.1} parent=55 // pred_fallthru
          _
      $region56: #{feature_extractor_forward.1} parent=5 // pred_fallthru
        _
    $region6: #{feature_extractor_forward.1} parent=1 // loop_footer
      %s18 = sadd.s32 1, %s14
    $region7: #{feature_extractor_forward.1} parent=1 // loop_footer_branch
      %13 = sbr.rel target = $region3
    $region8: #{feature_extractor_forward.1} parent=1 // loop_exit
      _
    %637 = vsyncpa [#allocation5], 1
    %s638 = scalar_lea.sflag [#allocation5], 1
    %639 = vsyncpa %s638, 1

</llo_original>
